<compile_context>
chip_gen: v5e
topology: v5e:2x2
jax: 0.10.0
libtpu: 0.0.40
codegen_flags: <defaults>
</compile_context>

<pallas_src>
import math

import jax
import jax.numpy as jnp
from jax.experimental import pallas as pl
from jax.experimental.pallas import tpu as pltpu

EPS = 1e-5
DROPOUT_P = 0.5
LEAKY_SLOPE = 0.01
NUM_CLASSES = 27
LANE = 128

# keep an element iff its 32 random bits >= threshold  (P(keep) = 1 - p)
_KEEP_THRESHOLD = int(round(DROPOUT_P * (1 << 32)))


def _round_up(n, m):
    return -(-n // m) * m


def _hash32(x):
    # lowbias32 mixer: full avalanche, only shifts / xors / 32-bit muls (VPU integer ops).
    x = x ^ (x >> jnp.uint32(16))
    x = x * jnp.uint32(0x7FEB352D)
    x = x ^ (x >> jnp.uint32(15))
    x = x * jnp.uint32(0x846CA68B)
    x = x ^ (x >> jnp.uint32(16))
    return x


def _keep_mask(seed_u32, tile_u32, tile_rows, shape, salt):
    """Bernoulli(1-p) keep mask; unique stream per (seed, grid step, row, lane, layer)."""
    row = jax.lax.broadcasted_iota(jnp.uint32, shape, 0)
    col = jax.lax.broadcasted_iota(jnp.uint32, shape, 1)
    global_row = tile_u32 * jnp.uint32(tile_rows) + row
    idx = global_row * jnp.uint32(LANE) + col
    key = (seed_u32 * jnp.uint32(0x9E3779B1)) ^ (jnp.uint32(salt) * jnp.uint32(0x85EBCA77))
    bits = _hash32(idx ^ key)
    bits = _hash32(bits + jnp.uint32(0x9E3779B9))
    return bits >= jnp.uint32(_KEEP_THRESHOLD)


def mlp_kernel(seed_ref, x_ref, w1_ref, b1_ref, w2_ref, b2_ref, w3_ref, b3_ref, o_ref):
    tile = pl.program_id(0).astype(jnp.uint32)
    seed = seed_ref[0].astype(jnp.uint32)
    tb = x_ref.shape[0]

    x = x_ref[...].astype(jnp.float32)

    # batch_norm(x.T, training=True).T == per-row normalization over the 66 features,
    # biased variance, eps=1e-5, no affine.  Single-pass stats: var = E[x^2] - E[x]^2.
    mean = jnp.mean(x, axis=1, keepdims=True)
    mean_sq = jnp.mean(x * x, axis=1, keepdims=True)
    var = jnp.maximum(mean_sq - mean * mean, 0.0)
    h = (x - mean) * jax.lax.rsqrt(var + EPS)

    def layer(h_in, w_ref, b_ref, salt):
        # Linear (dropout survivor scale already folded into the weights in the wrapper)
        # -> leaky_relu -> dropout (pure keep/zero select).
        z = jnp.dot(h_in, w_ref[...], preferred_element_type=jnp.float32) + b_ref[...]
        act = jnp.where(z >= 0.0, z, LEAKY_SLOPE * z)
        keep = _keep_mask(seed, tile, tb, act.shape, salt)
        return jnp.where(keep, act, 0.0)

    h = layer(h, w1_ref, b1_ref, 1)   # Linear(66 -> 32)  + lrelu + dropout
    h = layer(h, w2_ref, b2_ref, 2)   # Linear(32 -> 64)  + lrelu + dropout
    h = layer(h, w3_ref, b3_ref, 3)   # Linear(64 -> 128 padded, real 27) + lrelu + dropout

    o_ref[...] = h.astype(o_ref.dtype)


def init_linear(key, fan_in, fan_out):
    # Deterministic init mimicking nn.Linear (uniform +/- 1/sqrt(fan_in)).
    kw, kb = jax.random.split(key)
    bound = 1.0 / math.sqrt(fan_in)
    w = jax.random.uniform(kw, (fan_in, fan_out), jnp.float32, -bound, bound)
    b = jax.random.uniform(kb, (1, fan_out), jnp.float32, -bound, bound)
    return w, b


def init_params(key, layers=2, neurons_per_layer=32, input_shape=(22, 3),
                num_classes=NUM_CLASSES):
    input_neurons = input_shape[0] * input_shape[1]
    params = []
    keys = jax.random.split(key, layers + 1)
    params.append(init_linear(keys[0], input_neurons, neurons_per_layer))
    n = neurons_per_layer
    for i in range(layers - 1):
        params.append(init_linear(keys[i + 1], n, n * 2))
        n *= 2
    params.append(init_linear(keys[layers], n, num_classes))
    return params


def mlp_forward(x, params, seed=0, block_rows=1024):
    B = x.shape[0]
    x_flat = x.reshape(B, -1).astype(jnp.float32)          # (B, 66)
    in_features = x_flat.shape[1]

    (w1, b1), (w2, b2), (w3, b3) = params
    num_classes = w3.shape[1]

    # Fold the dropout survivor scale s = 1/(1-p) into downstream weights:
    #   dropout after layer1 -> w2 *= s
    #   dropout after layer2 -> w3 *= s
    #   dropout after layer3 (final, no next layer) -> w3 *= s, b3 *= s
    #   (leaky_relu is positively homogeneous, so scaling the pre-activation by s
    #    scales the activation by s exactly.)
    s = 1.0 / (1.0 - DROPOUT_P)
    w2 = w2 * s
    w3 = w3 * (s * s)
    b3 = b3 * s

    # Lane-dense output: pad class dim 27 -> 128 with zero columns; slice after the call.
    nc_pad = _round_up(max(num_classes, LANE), LANE)
    w3 = jnp.pad(w3, ((0, 0), (0, nc_pad - num_classes)))
    b3 = jnp.pad(b3, ((0, 0), (0, nc_pad - num_classes)))

    # Batch tiling: TB rows per grid step (multiple of 8); pad batch to a multiple of TB.
    tb = min(block_rows, _round_up(B, 8))
    b_pad = _round_up(B, tb)
    if b_pad != B:
        x_flat = jnp.pad(x_flat, ((0, b_pad - B), (0, 0)))

    const = lambda i: (0, 0)
    out = pl.pallas_call(
        mlp_kernel,
        out_shape=jax.ShapeDtypeStruct((b_pad, nc_pad), jnp.float32),
        grid=(b_pad // tb,),
        in_specs=[
            pl.BlockSpec(memory_space=pltpu.MemorySpace.SMEM),   # seed scalar
            pl.BlockSpec((tb, in_features), lambda i: (i, 0)),   # x: batch-tiled
            pl.BlockSpec(w1.shape, const),                       # weights/biases stay
            pl.BlockSpec(b1.shape, const),                       # VMEM-resident
            pl.BlockSpec(w2.shape, const),
            pl.BlockSpec(b2.shape, const),
            pl.BlockSpec(w3.shape, const),
            pl.BlockSpec(b3.shape, const),
        ],
        out_specs=pl.BlockSpec((tb, nc_pad), lambda i: (i, 0)),
        compiler_params=pltpu.CompilerParams(
            dimension_semantics=("parallel",)),
    )(jnp.asarray([seed], jnp.int32), x_flat, w1, b1, w2, b2, w3, b3)

    return out[:B, :num_classes]


if __name__ == "__main__":
    key = jax.random.PRNGKey(0)
    k_x, k_p = jax.random.split(key)

    # Input consistent with input_shape=(22, 3): batch=8 samples of 22 landmarks x 3 coords.
    x = jax.random.normal(k_x, (8, 22, 3), dtype=jnp.float32)

    params = init_params(k_p, layers=2, neurons_per_layer=32,
                         input_shape=(22, 3), num_classes=NUM_CLASSES)

    out = mlp_forward(x, params, seed=0)
    out = jax.block_until_ready(out)

    assert out.shape == (8, NUM_CLASSES), out.shape
    assert bool(jnp.all(jnp.isfinite(out))), "non-finite output"
    print("KERNEL_OK")
</pallas_src>

<mosaic_0001>
module attributes {stable_mosaic.version = 11 : i64} {
  func.func @mlp_kernel(%arg0: i32, %arg1: memref<1xi32, #tpu.memory_space<smem>>, %arg2: memref<8x66xf32, #tpu.memory_space<vmem>>, %arg3: memref<66x32xf32, #tpu.memory_space<vmem>>, %arg4: memref<1x32xf32, #tpu.memory_space<vmem>>, %arg5: memref<32x64xf32, #tpu.memory_space<vmem>>, %arg6: memref<1x64xf32, #tpu.memory_space<vmem>>, %arg7: memref<64x128xf32, #tpu.memory_space<vmem>>, %arg8: memref<1x128xf32, #tpu.memory_space<vmem>>, %arg9: memref<8x128xf32, #tpu.memory_space<vmem>>) attributes {dimension_semantics = [#tpu.dimension_semantics<parallel>], iteration_bounds = array<i64: 1>, scalar_prefetch = 0 : i64, scratch_operands = 0 : i64, tpu.core_type = #tpu.core_type<tc>, window_params = [{transform_indices = @transform_0, window_bounds = array<i64: 1>}, {transform_indices = @transform_1, window_bounds = array<i64: 8, 66>}, {pipeline_mode = #tpu.pipeline_mode<synchronous>, transform_indices = @transform_2, window_bounds = array<i64: 66, 32>}, {pipeline_mode = #tpu.pipeline_mode<synchronous>, transform_indices = @transform_3, window_bounds = array<i64: 1, 32>}, {pipeline_mode = #tpu.pipeline_mode<synchronous>, transform_indices = @transform_4, window_bounds = array<i64: 32, 64>}, {pipeline_mode = #tpu.pipeline_mode<synchronous>, transform_indices = @transform_5, window_bounds = array<i64: 1, 64>}, {pipeline_mode = #tpu.pipeline_mode<synchronous>, transform_indices = @transform_6, window_bounds = array<i64: 64, 128>}, {pipeline_mode = #tpu.pipeline_mode<synchronous>, transform_indices = @transform_7, window_bounds = array<i64: 1, 128>}, {transform_indices = @transform_8, window_bounds = array<i64: 8, 128>}]} {
    %c0 = arith.constant 0 : index
    %0 = memref.load %arg1[%c0] : memref<1xi32, #tpu.memory_space<smem>>
    %c0_0 = arith.constant 0 : index
    %c0_1 = arith.constant 0 : index
    %1 = vector.load %arg2[%c0_0, %c0_1] : memref<8x66xf32, #tpu.memory_space<vmem>>, vector<8x66xf32>
    %cst = arith.constant dense<0.000000e+00> : vector<8xf32>
    %2 = vector.multi_reduction <add>, %1, %cst [1] : vector<8x66xf32> to vector<8xf32>
    %3 = vector.shape_cast %2 : vector<8xf32> to vector<8x1xf32>
    %cst_2 = arith.constant 6.600000e+01 : f32
    %4 = vector.broadcast %cst_2 : f32 to vector<8x1xf32>
    %5 = arith.divf %3, %4 : vector<8x1xf32>
    %6 = arith.mulf %1, %1 : vector<8x66xf32>
    %cst_3 = arith.constant dense<0.000000e+00> : vector<8xf32>
    %7 = vector.multi_reduction <add>, %6, %cst_3 [1] : vector<8x66xf32> to vector<8xf32>
    %8 = vector.shape_cast %7 : vector<8xf32> to vector<8x1xf32>
    %cst_4 = arith.constant 6.600000e+01 : f32
    %9 = vector.broadcast %cst_4 : f32 to vector<8x1xf32>
    %10 = arith.divf %8, %9 : vector<8x1xf32>
    %11 = arith.mulf %5, %5 : vector<8x1xf32>
    %12 = arith.subf %10, %11 : vector<8x1xf32>
    %cst_5 = arith.constant 0.000000e+00 : f32
    %13 = vector.broadcast %cst_5 : f32 to vector<8x1xf32>
    %14 = arith.maximumf %12, %13 : vector<8x1xf32>
    %15 = vector.broadcast %5 : vector<8x1xf32> to vector<8x66xf32>
    %16 = arith.subf %1, %15 : vector<8x66xf32>
    %cst_6 = arith.constant 9.99999974E-6 : f32
    %17 = vector.broadcast %cst_6 : f32 to vector<8x1xf32>
    %18 = arith.addf %14, %17 : vector<8x1xf32>
    %19 = math.rsqrt %18 : vector<8x1xf32>
    %20 = vector.broadcast %19 : vector<8x1xf32> to vector<8x66xf32>
    %21 = arith.mulf %16, %20 : vector<8x66xf32>
    %c0_7 = arith.constant 0 : index
    %c0_8 = arith.constant 0 : index
    %22 = vector.load %arg3[%c0_7, %c0_8] : memref<66x32xf32, #tpu.memory_space<vmem>>, vector<66x32xf32>
    %cst_9 = arith.constant dense<0.000000e+00> : vector<8x32xf32>
    %23 = tpu.matmul %21, %22, %cst_9 {dimension_numbers = #tpu.dot_dimension_numbers<[1], [0], [0], [1], [0, 0, 1, 1], [], []>} : vector<8x66xf32>, vector<66x32xf32>, vector<8x32xf32> -> vector<8x32xf32>
    %c0_10 = arith.constant 0 : index
    %c0_11 = arith.constant 0 : index
    %24 = vector.load %arg4[%c0_10, %c0_11] : memref<1x32xf32, #tpu.memory_space<vmem>>, vector<1x32xf32>
    %25 = vector.broadcast %24 : vector<1x32xf32> to vector<8x32xf32>
    %26 = arith.addf %23, %25 : vector<8x32xf32>
    %cst_12 = arith.constant 0.000000e+00 : f32
    %27 = vector.broadcast %cst_12 : f32 to vector<8x32xf32>
    %28 = arith.cmpf oge, %26, %27 : vector<8x32xf32>
    %cst_13 = arith.constant 0.00999999977 : f32
    %29 = vector.broadcast %cst_13 : f32 to vector<8x32xf32>
    %30 = arith.mulf %29, %26 : vector<8x32xf32>
    %31 = arith.select %28, %26, %30 : vector<8x32xi1>, vector<8x32xf32>
    %32 = tpu.iota {dimensions = array<i32: 0>} : vector<8x32xi32>
    %33 = tpu.iota {dimensions = array<i32: 1>} : vector<8x32xi32>
    %c8_i32 = arith.constant 8 : i32
    %34 = arith.muli %arg0, %c8_i32 : i32
    %35 = vector.broadcast %34 : i32 to vector<8x32xi32>
    %36 = arith.addi %35, %32 : vector<8x32xi32>
    %c128_i32 = arith.constant 128 : i32
    %37 = vector.broadcast %c128_i32 : i32 to vector<8x32xi32>
    %38 = arith.muli %36, %37 : vector<8x32xi32>
    %39 = arith.addi %38, %33 : vector<8x32xi32>
    %c-1640531535_i32 = arith.constant -1640531535 : i32
    %40 = arith.muli %0, %c-1640531535_i32 : i32
    %c1_i32 = arith.constant 1 : i32
    %c-2048144777_i32 = arith.constant -2048144777 : i32
    %41 = arith.muli %c1_i32, %c-2048144777_i32 : i32
    %42 = arith.xori %40, %41 : i32
    %43 = vector.broadcast %42 : i32 to vector<8x32xi32>
    %44 = arith.xori %39, %43 : vector<8x32xi32>
    %c16_i32 = arith.constant 16 : i32
    %45 = vector.broadcast %c16_i32 : i32 to vector<8x32xi32>
    %46 = arith.shrui %44, %45 : vector<8x32xi32>
    %47 = arith.xori %44, %46 : vector<8x32xi32>
    %c2146121005_i32 = arith.constant 2146121005 : i32
    %48 = vector.broadcast %c2146121005_i32 : i32 to vector<8x32xi32>
    %49 = arith.muli %47, %48 : vector<8x32xi32>
    %c15_i32 = arith.constant 15 : i32
    %50 = vector.broadcast %c15_i32 : i32 to vector<8x32xi32>
    %51 = arith.shrui %49, %50 : vector<8x32xi32>
    %52 = arith.xori %49, %51 : vector<8x32xi32>
    %c-2073254261_i32 = arith.constant -2073254261 : i32
    %53 = vector.broadcast %c-2073254261_i32 : i32 to vector<8x32xi32>
    %54 = arith.muli %52, %53 : vector<8x32xi32>
    %c16_i32_14 = arith.constant 16 : i32
    %55 = vector.broadcast %c16_i32_14 : i32 to vector<8x32xi32>
    %56 = arith.shrui %54, %55 : vector<8x32xi32>
    %57 = arith.xori %54, %56 : vector<8x32xi32>
    %c-1640531527_i32 = arith.constant -1640531527 : i32
    %58 = vector.broadcast %c-1640531527_i32 : i32 to vector<8x32xi32>
    %59 = arith.addi %57, %58 : vector<8x32xi32>
    %c16_i32_15 = arith.constant 16 : i32
    %60 = vector.broadcast %c16_i32_15 : i32 to vector<8x32xi32>
    %61 = arith.shrui %59, %60 : vector<8x32xi32>
    %62 = arith.xori %59, %61 : vector<8x32xi32>
    %c2146121005_i32_16 = arith.constant 2146121005 : i32
    %63 = vector.broadcast %c2146121005_i32_16 : i32 to vector<8x32xi32>
    %64 = arith.muli %62, %63 : vector<8x32xi32>
    %c15_i32_17 = arith.constant 15 : i32
    %65 = vector.broadcast %c15_i32_17 : i32 to vector<8x32xi32>
    %66 = arith.shrui %64, %65 : vector<8x32xi32>
    %67 = arith.xori %64, %66 : vector<8x32xi32>
    %c-2073254261_i32_18 = arith.constant -2073254261 : i32
    %68 = vector.broadcast %c-2073254261_i32_18 : i32 to vector<8x32xi32>
    %69 = arith.muli %67, %68 : vector<8x32xi32>
    %c16_i32_19 = arith.constant 16 : i32
    %70 = vector.broadcast %c16_i32_19 : i32 to vector<8x32xi32>
    %71 = arith.shrui %69, %70 : vector<8x32xi32>
    %72 = arith.xori %69, %71 : vector<8x32xi32>
    %c-2147483648_i32 = arith.constant -2147483648 : i32
    %73 = vector.broadcast %c-2147483648_i32 : i32 to vector<8x32xi32>
    %74 = arith.cmpi uge, %72, %73 : vector<8x32xi32>
    %cst_20 = arith.constant 0.000000e+00 : f32
    %75 = vector.broadcast %cst_20 : f32 to vector<8x32xf32>
    %76 = arith.select %74, %31, %75 : vector<8x32xi1>, vector<8x32xf32>
    %c0_21 = arith.constant 0 : index
    %c0_22 = arith.constant 0 : index
    %77 = vector.load %arg5[%c0_21, %c0_22] : memref<32x64xf32, #tpu.memory_space<vmem>>, vector<32x64xf32>
    %cst_23 = arith.constant dense<0.000000e+00> : vector<8x64xf32>
    %78 = tpu.matmul %76, %77, %cst_23 {dimension_numbers = #tpu.dot_dimension_numbers<[1], [0], [0], [1], [0, 0, 1, 1], [], []>} : vector<8x32xf32>, vector<32x64xf32>, vector<8x64xf32> -> vector<8x64xf32>
    %c0_24 = arith.constant 0 : index
    %c0_25 = arith.constant 0 : index
    %79 = vector.load %arg6[%c0_24, %c0_25] : memref<1x64xf32, #tpu.memory_space<vmem>>, vector<1x64xf32>
    %80 = vector.broadcast %79 : vector<1x64xf32> to vector<8x64xf32>
    %81 = arith.addf %78, %80 : vector<8x64xf32>
    %cst_26 = arith.constant 0.000000e+00 : f32
    %82 = vector.broadcast %cst_26 : f32 to vector<8x64xf32>
    %83 = arith.cmpf oge, %81, %82 : vector<8x64xf32>
    %cst_27 = arith.constant 0.00999999977 : f32
    %84 = vector.broadcast %cst_27 : f32 to vector<8x64xf32>
    %85 = arith.mulf %84, %81 : vector<8x64xf32>
    %86 = arith.select %83, %81, %85 : vector<8x64xi1>, vector<8x64xf32>
    %87 = tpu.iota {dimensions = array<i32: 0>} : vector<8x64xi32>
    %88 = tpu.iota {dimensions = array<i32: 1>} : vector<8x64xi32>
    %c8_i32_28 = arith.constant 8 : i32
    %89 = arith.muli %arg0, %c8_i32_28 : i32
    %90 = vector.broadcast %89 : i32 to vector<8x64xi32>
    %91 = arith.addi %90, %87 : vector<8x64xi32>
    %c128_i32_29 = arith.constant 128 : i32
    %92 = vector.broadcast %c128_i32_29 : i32 to vector<8x64xi32>
    %93 = arith.muli %91, %92 : vector<8x64xi32>
    %94 = arith.addi %93, %88 : vector<8x64xi32>
    %c-1640531535_i32_30 = arith.constant -1640531535 : i32
    %95 = arith.muli %0, %c-1640531535_i32_30 : i32
    %c2_i32 = arith.constant 2 : i32
    %c-2048144777_i32_31 = arith.constant -2048144777 : i32
    %96 = arith.muli %c2_i32, %c-2048144777_i32_31 : i32
    %97 = arith.xori %95, %96 : i32
    %98 = vector.broadcast %97 : i32 to vector<8x64xi32>
    %99 = arith.xori %94, %98 : vector<8x64xi32>
    %c16_i32_32 = arith.constant 16 : i32
    %100 = vector.broadcast %c16_i32_32 : i32 to vector<8x64xi32>
    %101 = arith.shrui %99, %100 : vector<8x64xi32>
    %102 = arith.xori %99, %101 : vector<8x64xi32>
    %c2146121005_i32_33 = arith.constant 2146121005 : i32
    %103 = vector.broadcast %c2146121005_i32_33 : i32 to vector<8x64xi32>
    %104 = arith.muli %102, %103 : vector<8x64xi32>
    %c15_i32_34 = arith.constant 15 : i32
    %105 = vector.broadcast %c15_i32_34 : i32 to vector<8x64xi32>
    %106 = arith.shrui %104, %105 : vector<8x64xi32>
    %107 = arith.xori %104, %106 : vector<8x64xi32>
    %c-2073254261_i32_35 = arith.constant -2073254261 : i32
    %108 = vector.broadcast %c-2073254261_i32_35 : i32 to vector<8x64xi32>
    %109 = arith.muli %107, %108 : vector<8x64xi32>
    %c16_i32_36 = arith.constant 16 : i32
    %110 = vector.broadcast %c16_i32_36 : i32 to vector<8x64xi32>
    %111 = arith.shrui %109, %110 : vector<8x64xi32>
    %112 = arith.xori %109, %111 : vector<8x64xi32>
    %c-1640531527_i32_37 = arith.constant -1640531527 : i32
    %113 = vector.broadcast %c-1640531527_i32_37 : i32 to vector<8x64xi32>
    %114 = arith.addi %112, %113 : vector<8x64xi32>
    %c16_i32_38 = arith.constant 16 : i32
    %115 = vector.broadcast %c16_i32_38 : i32 to vector<8x64xi32>
    %116 = arith.shrui %114, %115 : vector<8x64xi32>
    %117 = arith.xori %114, %116 : vector<8x64xi32>
    %c2146121005_i32_39 = arith.constant 2146121005 : i32
    %118 = vector.broadcast %c2146121005_i32_39 : i32 to vector<8x64xi32>
    %119 = arith.muli %117, %118 : vector<8x64xi32>
    %c15_i32_40 = arith.constant 15 : i32
    %120 = vector.broadcast %c15_i32_40 : i32 to vector<8x64xi32>
    %121 = arith.shrui %119, %120 : vector<8x64xi32>
    %122 = arith.xori %119, %121 : vector<8x64xi32>
    %c-2073254261_i32_41 = arith.constant -2073254261 : i32
    %123 = vector.broadcast %c-2073254261_i32_41 : i32 to vector<8x64xi32>
    %124 = arith.muli %122, %123 : vector<8x64xi32>
    %c16_i32_42 = arith.constant 16 : i32
    %125 = vector.broadcast %c16_i32_42 : i32 to vector<8x64xi32>
    %126 = arith.shrui %124, %125 : vector<8x64xi32>
    %127 = arith.xori %124, %126 : vector<8x64xi32>
    %c-2147483648_i32_43 = arith.constant -2147483648 : i32
    %128 = vector.broadcast %c-2147483648_i32_43 : i32 to vector<8x64xi32>
    %129 = arith.cmpi uge, %127, %128 : vector<8x64xi32>
    %cst_44 = arith.constant 0.000000e+00 : f32
    %130 = vector.broadcast %cst_44 : f32 to vector<8x64xf32>
    %131 = arith.select %129, %86, %130 : vector<8x64xi1>, vector<8x64xf32>
    %c0_45 = arith.constant 0 : index
    %c0_46 = arith.constant 0 : index
    %132 = vector.load %arg7[%c0_45, %c0_46] : memref<64x128xf32, #tpu.memory_space<vmem>>, vector<64x128xf32>
    %cst_47 = arith.constant dense<0.000000e+00> : vector<8x128xf32>
    %133 = tpu.matmul %131, %132, %cst_47 {dimension_numbers = #tpu.dot_dimension_numbers<[1], [0], [0], [1], [0, 0, 1, 1], [], []>} : vector<8x64xf32>, vector<64x128xf32>, vector<8x128xf32> -> vector<8x128xf32>
    %c0_48 = arith.constant 0 : index
    %c0_49 = arith.constant 0 : index
    %134 = vector.load %arg8[%c0_48, %c0_49] : memref<1x128xf32, #tpu.memory_space<vmem>>, vector<1x128xf32>
    %135 = vector.broadcast %134 : vector<1x128xf32> to vector<8x128xf32>
    %136 = arith.addf %133, %135 : vector<8x128xf32>
    %cst_50 = arith.constant 0.000000e+00 : f32
    %137 = vector.broadcast %cst_50 : f32 to vector<8x128xf32>
    %138 = arith.cmpf oge, %136, %137 : vector<8x128xf32>
    %cst_51 = arith.constant 0.00999999977 : f32
    %139 = vector.broadcast %cst_51 : f32 to vector<8x128xf32>
    %140 = arith.mulf %139, %136 : vector<8x128xf32>
    %141 = arith.select %138, %136, %140 : vector<8x128xi1>, vector<8x128xf32>
    %142 = tpu.iota {dimensions = array<i32: 0>} : vector<8x128xi32>
    %143 = tpu.iota {dimensions = array<i32: 1>} : vector<8x128xi32>
    %c8_i32_52 = arith.constant 8 : i32
    %144 = arith.muli %arg0, %c8_i32_52 : i32
    %145 = vector.broadcast %144 : i32 to vector<8x128xi32>
    %146 = arith.addi %145, %142 : vector<8x128xi32>
    %c128_i32_53 = arith.constant 128 : i32
    %147 = vector.broadcast %c128_i32_53 : i32 to vector<8x128xi32>
    %148 = arith.muli %146, %147 : vector<8x128xi32>
    %149 = arith.addi %148, %143 : vector<8x128xi32>
    %c-1640531535_i32_54 = arith.constant -1640531535 : i32
    %150 = arith.muli %0, %c-1640531535_i32_54 : i32
    %c3_i32 = arith.constant 3 : i32
    %c-2048144777_i32_55 = arith.constant -2048144777 : i32
    %151 = arith.muli %c3_i32, %c-2048144777_i32_55 : i32
    %152 = arith.xori %150, %151 : i32
    %153 = vector.broadcast %152 : i32 to vector<8x128xi32>
    %154 = arith.xori %149, %153 : vector<8x128xi32>
    %c16_i32_56 = arith.constant 16 : i32
    %155 = vector.broadcast %c16_i32_56 : i32 to vector<8x128xi32>
    %156 = arith.shrui %154, %155 : vector<8x128xi32>
    %157 = arith.xori %154, %156 : vector<8x128xi32>
    %c2146121005_i32_57 = arith.constant 2146121005 : i32
    %158 = vector.broadcast %c2146121005_i32_57 : i32 to vector<8x128xi32>
    %159 = arith.muli %157, %158 : vector<8x128xi32>
    %c15_i32_58 = arith.constant 15 : i32
    %160 = vector.broadcast %c15_i32_58 : i32 to vector<8x128xi32>
    %161 = arith.shrui %159, %160 : vector<8x128xi32>
    %162 = arith.xori %159, %161 : vector<8x128xi32>
    %c-2073254261_i32_59 = arith.constant -2073254261 : i32
    %163 = vector.broadcast %c-2073254261_i32_59 : i32 to vector<8x128xi32>
    %164 = arith.muli %162, %163 : vector<8x128xi32>
    %c16_i32_60 = arith.constant 16 : i32
    %165 = vector.broadcast %c16_i32_60 : i32 to vector<8x128xi32>
    %166 = arith.shrui %164, %165 : vector<8x128xi32>
    %167 = arith.xori %164, %166 : vector<8x128xi32>
    %c-1640531527_i32_61 = arith.constant -1640531527 : i32
    %168 = vector.broadcast %c-1640531527_i32_61 : i32 to vector<8x128xi32>
    %169 = arith.addi %167, %168 : vector<8x128xi32>
    %c16_i32_62 = arith.constant 16 : i32
    %170 = vector.broadcast %c16_i32_62 : i32 to vector<8x128xi32>
    %171 = arith.shrui %169, %170 : vector<8x128xi32>
    %172 = arith.xori %169, %171 : vector<8x128xi32>
    %c2146121005_i32_63 = arith.constant 2146121005 : i32
    %173 = vector.broadcast %c2146121005_i32_63 : i32 to vector<8x128xi32>
    %174 = arith.muli %172, %173 : vector<8x128xi32>
    %c15_i32_64 = arith.constant 15 : i32
    %175 = vector.broadcast %c15_i32_64 : i32 to vector<8x128xi32>
    %176 = arith.shrui %174, %175 : vector<8x128xi32>
    %177 = arith.xori %174, %176 : vector<8x128xi32>
    %c-2073254261_i32_65 = arith.constant -2073254261 : i32
    %178 = vector.broadcast %c-2073254261_i32_65 : i32 to vector<8x128xi32>
    %179 = arith.muli %177, %178 : vector<8x128xi32>
    %c16_i32_66 = arith.constant 16 : i32
    %180 = vector.broadcast %c16_i32_66 : i32 to vector<8x128xi32>
    %181 = arith.shrui %179, %180 : vector<8x128xi32>
    %182 = arith.xori %179, %181 : vector<8x128xi32>
    %c-2147483648_i32_67 = arith.constant -2147483648 : i32
    %183 = vector.broadcast %c-2147483648_i32_67 : i32 to vector<8x128xi32>
    %184 = arith.cmpi uge, %182, %183 : vector<8x128xi32>
    %cst_68 = arith.constant 0.000000e+00 : f32
    %185 = vector.broadcast %cst_68 : f32 to vector<8x128xf32>
    %186 = arith.select %184, %141, %185 : vector<8x128xi1>, vector<8x128xf32>
    %c0_69 = arith.constant 0 : index
    %c0_70 = arith.constant 0 : index
    %187 = vector.load %arg9[%c0_69, %c0_70] : memref<8x128xf32, #tpu.memory_space<vmem>>, vector<8x128xf32>
    tpu.vector_store %arg9[%c0_69, %c0_70], %186 {strides = array<i32>} : memref<8x128xf32, #tpu.memory_space<vmem>>, vector<8x128xf32>,
    return
  }
  func.func @transform_0(%arg0: i32) -> i32 {
    %c0_i32 = arith.constant 0 : i32
    %c0_i32_0 = arith.constant 0 : i32
    return %c0_i32 : i32
  }
  func.func @transform_1(%arg0: i32) -> (i32, i32) {
    %c0_i32 = arith.constant 0 : i32
    %c0_i32_0 = arith.constant 0 : i32
    return %arg0, %c0_i32 : i32, i32
  }
  func.func @transform_2(%arg0: i32) -> (i32, i32) {
    %c0_i32 = arith.constant 0 : i32
    %c0_i32_0 = arith.constant 0 : i32
    %c0_i32_1 = arith.constant 0 : i32
    return %c0_i32, %c0_i32_0 : i32, i32
  }
  func.func @transform_3(%arg0: i32) -> (i32, i32) {
    %c0_i32 = arith.constant 0 : i32
    %c0_i32_0 = arith.constant 0 : i32
    %c0_i32_1 = arith.constant 0 : i32
    return %c0_i32, %c0_i32_0 : i32, i32
  }
  func.func @transform_4(%arg0: i32) -> (i32, i32) {
    %c0_i32 = arith.constant 0 : i32
    %c0_i32_0 = arith.constant 0 : i32
    %c0_i32_1 = arith.constant 0 : i32
    return %c0_i32, %c0_i32_0 : i32, i32
  }
  func.func @transform_5(%arg0: i32) -> (i32, i32) {
    %c0_i32 = arith.constant 0 : i32
    %c0_i32_0 = arith.constant 0 : i32
    %c0_i32_1 = arith.constant 0 : i32
    return %c0_i32, %c0_i32_0 : i32, i32
  }
  func.func @transform_6(%arg0: i32) -> (i32, i32) {
    %c0_i32 = arith.constant 0 : i32
    %c0_i32_0 = arith.constant 0 : i32
    %c0_i32_1 = arith.constant 0 : i32
    return %c0_i32, %c0_i32_0 : i32, i32
  }
  func.func @transform_7(%arg0: i32) -> (i32, i32) {
    %c0_i32 = arith.constant 0 : i32
    %c0_i32_0 = arith.constant 0 : i32
    %c0_i32_1 = arith.constant 0 : i32
    return %c0_i32, %c0_i32_0 : i32, i32
  }
  func.func @transform_8(%arg0: i32) -> (i32, i32) {
    %c0_i32 = arith.constant 0 : i32
    %c0_i32_0 = arith.constant 0 : i32
    return %arg0, %c0_i32 : i32, i32
  }
}

</mosaic_0001>

<llo_original>
// kernel: tpu_custom_call.1
$region0: #{tpu_custom_call.1}
  #allocation0 [shape = 'u32[]', space=smem, size = 0x4, offset = 0x4, fixed_abs, tag = 'smem constant byte address 0x4 - core index']
  #allocation1 [shape = 'u32[72,128]{1,0:T(1,128)}', space=vmem, size = 0x9000, scoped, tag = 'internal scratch']
  #allocation2 [shape = 's32[1]{0:T(128)S(6)}', space=smem, size = 0x200, scoped, tag = 'scoped memory for tpu_custom_call.1']
  %s0 = inlined_call_operand.<no memory space> [shape: s32[1], index: 0, kind: input, shape index: {}]
  %s1 = inlined_call_operand.vmem [shape: f32[8,66], index: 1, kind: input, shape index: {}]
  %s2 = inlined_call_operand.vmem [shape: f32[66,32], index: 2, kind: input, shape index: {}]
  %s3 = inlined_call_operand.vmem [shape: f32[1,32], index: 3, kind: input, shape index: {}]
  %s4 = inlined_call_operand.vmem [shape: f32[32,64], index: 4, kind: input, shape index: {}]
  %s5 = inlined_call_operand.vmem [shape: f32[1,64], index: 5, kind: input, shape index: {}]
  %s6 = inlined_call_operand.vmem [shape: f32[64,128], index: 6, kind: input, shape index: {}]
  %s7 = inlined_call_operand.vmem [shape: f32[1,128], index: 7, kind: input, shape index: {}]
  %s8 = inlined_call_operand.hbm [shape: f32[8,128], index: 8, kind: output, shape index: {}]
  %s9 = sld [smem:[#allocation0]]
  $region42: #{tpu_custom_call.1} parent=0
    _
  %s11 = ssub.s32 1, %s9
  %s12 = scalar_select 0, %s11, %s9
  %13 = sst [smem:[#allocation2]] %s0
  $region1: #{tpu_custom_call.1} parent=0
    #allocation3 [shape = 'u8[4096]{0}', space=vmem, size = 0x1000, scoped, tag = 'output window, operand 0, single buffered']
    #allocation4 [shape = 's32[1]{0}', space=sflag, size = 0x4, scoped, tag = 'scoped memory for tpu_custom_call.1']
    %14 = vsyncpa [#allocation4], 0
    // Predicated region
    $region2: #{tpu_custom_call.1} parent=1 // pred_check
      _
    $region3: #{tpu_custom_call.1} parent=1 // pred_check_branch
      %16 = sbr.rel (0) target = $region5
    $region4: #{tpu_custom_call.1} parent=1 // pred_region
      _
    $region5: #{tpu_custom_call.1} parent=1 // pred_fallthru
      _
    // Predicated region
    $region6: #{tpu_custom_call.1} parent=1 // pred_check
      _
    $region7: #{tpu_custom_call.1} parent=1 // pred_check_branch
      %18 = sbr.rel (0) target = $region9
    $region8: #{tpu_custom_call.1} parent=1 // pred_region
      _
    $region9: #{tpu_custom_call.1} parent=1 // pred_fallthru
      _
    // Predicated region
    $region10: #{tpu_custom_call.1} parent=1 // pred_check
      _
    $region11: #{tpu_custom_call.1} parent=1 // pred_check_branch
      %20 = sbr.rel (0) target = $region13
    $region12: #{tpu_custom_call.1} parent=1 // pred_region
      _
    $region13: #{tpu_custom_call.1} parent=1 // pred_fallthru
      _
    // Predicated region
    $region14: #{tpu_custom_call.1} parent=1 // pred_check
      _
    $region15: #{tpu_custom_call.1} parent=1 // pred_check_branch
      %22 = sbr.rel (0) target = $region17
    $region16: #{tpu_custom_call.1} parent=1 // pred_region
      _
    $region17: #{tpu_custom_call.1} parent=1 // pred_fallthru
      _
    // Predicated region
    $region18: #{tpu_custom_call.1} parent=1 // pred_check
      _
    $region19: #{tpu_custom_call.1} parent=1 // pred_check_branch
      %24 = sbr.rel (0) target = $region21
    $region20: #{tpu_custom_call.1} parent=1 // pred_region
      _
    $region21: #{tpu_custom_call.1} parent=1 // pred_fallthru
      _
    // Predicated region
    $region22: #{tpu_custom_call.1} parent=1 // pred_check
      _
    $region23: #{tpu_custom_call.1} parent=1 // pred_check_branch
      %26 = sbr.rel (0) target = $region25
    $region24: #{tpu_custom_call.1} parent=1 // pred_region
      _
    $region25: #{tpu_custom_call.1} parent=1 // pred_fallthru
      _
    // Predicated region
    $region26: #{tpu_custom_call.1} parent=1 // pred_check
      _
    $region27: #{tpu_custom_call.1} parent=1 // pred_check_branch
      %28 = sbr.rel (0) target = $region29
    $region28: #{tpu_custom_call.1} parent=1 // pred_region
      _
    $region29: #{tpu_custom_call.1} parent=1 // pred_fallthru
      _
    // Predicated region
    $region30: #{tpu_custom_call.1} parent=1 // pred_check
      _
    $region31: #{tpu_custom_call.1} parent=1 // pred_check_branch
      %30 = sbr.rel (0) target = $region33
    $region32: #{tpu_custom_call.1} parent=1 // pred_region
      _
    $region33: #{tpu_custom_call.1} parent=1 // pred_fallthru
      _
    %s31 = sld [smem:[#allocation2]]
    %v32 = vld [vmem:[%s1] sm:$0xff]
    %vm33 = vcmask 539648
    %v34 = vsel %vm33, %v32, 0.0
    %35 = vadd.xlane.f32.xlu0 %v34
    %v36 = vpop.xlane.xlu0 %35
    %v37 = vrcp.pop 66.0
    %v38 = vmul.f32 66.0, %v37
    %v39 = vsub.f32 1.0, %v38
    %v40 = vmul.f32 %v37, %v39
    %v41 = vadd.f32 %v37, %v40
    %vm42 = vweird.f32 %v37
    %v43 = vsel %vm42, %v37, %v41
    %v44 = vmul.f32 %v36, %v43
    %v45 = vmul.f32 %v32, %v32
    %v46 = vsel %vm33, %v45, 0.0
    %47 = vadd.xlane.f32.xlu0 %v46
    %v48 = vpop.xlane.xlu0 %47
    %v49 = vmul.f32 %v48, %v43
    %v50 = vmul.f32 %v44, %v44
    %v51 = vsub.f32 %v49, %v50
    %v52 = vmax.f32 %v51, 0.0
    %v53 = vsub.f32 %v32, %v44
    %v54 = vadd.f32 %v52, 1e-05
    %v55 = vrsqrt.pop %v54
    %v56 = vmul.f32 %v55, %v54
    %v57 = vmul.f32 %v56, %v55
    %v58 = vmul.f32 0.5, %v57
    %v59 = vsub.f32 1.5, %v58
    %v60 = vmul.f32 %v55, %v59
    %vm61 = vweird.f32 %v54
    %vm62 = vweird.f32 %v55
    %vm63 = vmor %vm61, %vm62
    %v64 = vsel %vm63, %v55, %v60
    %v65 = vmul.f32 %v53, %v64
    %v66 = vld [vmem:[%s2] sm:$0xff]
    %v67 = vld [vmem:[%s2 + $0x8] sm:$0xff]
    %v68 = vld [vmem:[%s2 + $0x10] sm:$0xff]
    %v69 = vld [vmem:[%s2 + $0x18] sm:$0xff]
    %v70 = vld [vmem:[%s2 + $0x20] sm:$0xff]
    %v71 = vld [vmem:[%s2 + $0x28] sm:$0xff]
    %v72 = vld [vmem:[%s2 + $0x30] sm:$0xff]
    %v73 = vld [vmem:[%s2 + $0x38] sm:$0xff]
    %v74 = vld [vmem:[%s2 + $0x40] sm:$0x3]
    %v75 = vld [vmem:[%s3] sm:$0x1]
    %v77 = vperm.slane %v75, 0
    %v80 = vsel %vm33, %v65, 0
    %vm82 = vcmask 1041408
    %v84 = vsel %vm82, %v74, 0
    %86 = vmatpush.msra.mxu0 0.0
    %87 = vmatpush.msra.mxu0 0.0
    %88 = vmatpush.msra.mxu0 0.0
    %89 = vmatpush.msra.mxu0 0.0
    %90 = vmatpush.msra.mxu0 0.0
    %91 = vmatpush.msra.mxu0 0.0
    %92 = vmatpush.msra.mxu0 0.0
    %93 = vmatpush.msra.mxu0 %v84
    %94 = vmatpush.msra.mxu0 %v73
    %95 = vmatpush.msra.mxu0 %v72
    %96 = vmatpush.msra.mxu0 %v71
    %97 = vmatpush.msra.mxu0 %v70
    %98 = vmatpush.msra.mxu0 %v69
    %99 = vmatpush.msra.mxu0 %v68
    %100 = vmatpush.msra.mxu0 %v67
    %101 = vmatpush.msra.mxu0 %v66
    %102 = vmatmul.f32.gmra.mxu0 %v80
    %v103 = vpop.f32.mrf.mxu0
    %v104 = vadd.f32 %v77, %v103
    %105 = vdwg.mxu0
    %vm106 = vcmp.ge.f32.partialorder %v104, 0.0
    %v107 = vmul.f32 %v104, 0.01
    %v108 = vsel %vm106, %v104, %v107
    %v109 = vlaneseq
    %v110 = vshrl.u32 %v109, 7
    %v111 = vlaneseq
    %v112 = vand.u32 %v111, 127
    %s113 = smul.u32 0, 8
    %v114 = vstv %s113
    %v115 = vadd.s32 %v114, %v110
    %v116 = vmul.u32 %v115, 128
    %v117 = vadd.s32 %v116, %v112
    %s118 = smul.u32 %s31, 2654435761
    %s119 = sxor.u32 %s118, 2246822519
    %v120 = vstv %s119
    %v121 = vxor.u32 %v117, %v120
    %v122 = vshrl.u32 %v121, 16
    %v123 = vxor.u32 %v121, %v122
    %v124 = vmul.u32 %v123, 2146121005
    %v125 = vshrl.u32 %v124, 15
    %v126 = vxor.u32 %v124, %v125
    %v127 = vmul.u32 %v126, 2221713035
    %v128 = vshrl.u32 %v127, 16
    %v129 = vxor.u32 %v127, %v128
    %v130 = vadd.s32 %v129, 2654435769
    %v131 = vshrl.u32 %v130, 16
    %v132 = vxor.u32 %v130, %v131
    %v133 = vmul.u32 %v132, 2146121005
    %v134 = vshrl.u32 %v133, 15
    %v135 = vxor.u32 %v133, %v134
    %v136 = vmul.u32 %v135, 2221713035
    %v137 = vshrl.u32 %v136, 16
    %v138 = vxor.u32 %v136, %v137
    %v139 = vadd.s32 %v138, 2147483648
    %vm141 = vcmp.ge.s32.totalorder %v139, 0
    %v142 = vsel %vm141, %v108, 0.0
    %v143 = vld [vmem:[%s4] sm:$0xff]
    %v144 = vld [vmem:[%s4 + $0x8] sm:$0xff]
    %v145 = vld [vmem:[%s4 + $0x10] sm:$0xff]
    %v146 = vld [vmem:[%s4 + $0x18] sm:$0xff]
    %v147 = vld [vmem:[%s5] sm:$0x1]
    %v149 = vperm.slane %v147, 0
    %vm151 = vcmask 261120
    %v153 = vsel %vm151, %v142, 0
    %155 = vmatpush.msra.mxu0 0.0
    %156 = vmatpush.msra.mxu0 0.0
    %157 = vmatpush.msra.mxu0 0.0
    %158 = vmatpush.msra.mxu0 0.0
    %159 = vmatpush.msra.mxu0 0.0
    %160 = vmatpush.msra.mxu0 0.0
    %161 = vmatpush.msra.mxu0 0.0
    %162 = vmatpush.msra.mxu0 0.0
    %163 = vmatpush.msra.mxu0 0.0
    %164 = vmatpush.msra.mxu0 0.0
    %165 = vmatpush.msra.mxu0 0.0
    %166 = vmatpush.msra.mxu0 0.0
    %167 = vmatpush.msra.mxu0 %v146
    %168 = vmatpush.msra.mxu0 %v145
    %169 = vmatpush.msra.mxu0 %v144
    %170 = vmatpush.msra.mxu0 %v143
    %171 = vmatmul.f32.gmra.mxu0 %v153
    %v172 = vpop.f32.mrf.mxu0
    %v173 = vadd.f32 %v149, %v172
    %174 = vdwg.mxu0
    %vm175 = vcmp.ge.f32.partialorder %v173, 0.0
    %v176 = vmul.f32 %v173, 0.01
    %v177 = vsel %vm175, %v173, %v176
    %s178 = sxor.u32 %s118, 198677742
    %v179 = vstv %s178
    %v180 = vxor.u32 %v117, %v179
    %v181 = vshrl.u32 %v180, 16
    %v182 = vxor.u32 %v180, %v181
    %v183 = vmul.u32 %v182, 2146121005
    %v184 = vshrl.u32 %v183, 15
    %v185 = vxor.u32 %v183, %v184
    %v186 = vmul.u32 %v185, 2221713035
    %v187 = vshrl.u32 %v186, 16
    %v188 = vxor.u32 %v186, %v187
    %v189 = vadd.s32 %v188, 2654435769
    %v190 = vshrl.u32 %v189, 16
    %v191 = vxor.u32 %v189, %v190
    %v192 = vmul.u32 %v191, 2146121005
    %v193 = vshrl.u32 %v192, 15
    %v194 = vxor.u32 %v192, %v193
    %v195 = vmul.u32 %v194, 2221713035
    %v196 = vshrl.u32 %v195, 16
    %v197 = vxor.u32 %v195, %v196
    %v198 = vadd.s32 %v197, 2147483648
    %vm200 = vcmp.ge.s32.totalorder %v198, 0
    %v201 = vsel %vm200, %v177, 0.0
    %v202 = vld [vmem:[%s6] sm:$0xff]
    %v203 = vld [vmem:[%s6 + $0x8] sm:$0xff]
    %v204 = vld [vmem:[%s6 + $0x10] sm:$0xff]
    %v205 = vld [vmem:[%s6 + $0x18] sm:$0xff]
    %v206 = vld [vmem:[%s6 + $0x20] sm:$0xff]
    %v207 = vld [vmem:[%s6 + $0x28] sm:$0xff]
    %v208 = vld [vmem:[%s6 + $0x30] sm:$0xff]
    %v209 = vld [vmem:[%s6 + $0x38] sm:$0xff]
    %v210 = vld [vmem:[%s7] sm:$0x1]
    %v212 = vperm.slane %v210, 0
    %vm214 = vcmask 523264
    %v216 = vsel %vm214, %v201, 0
    %218 = vmatpush.msra.mxu0 0.0
    %219 = vmatpush.msra.mxu0 0.0
    %220 = vmatpush.msra.mxu0 0.0
    %221 = vmatpush.msra.mxu0 0.0
    %222 = vmatpush.msra.mxu0 0.0
    %223 = vmatpush.msra.mxu0 0.0
    %224 = vmatpush.msra.mxu0 0.0
    %225 = vmatpush.msra.mxu0 0.0
    %226 = vmatpush.msra.mxu0 %v209
    %227 = vmatpush.msra.mxu0 %v208
    %228 = vmatpush.msra.mxu0 %v207
    %229 = vmatpush.msra.mxu0 %v206
    %230 = vmatpush.msra.mxu0 %v205
    %231 = vmatpush.msra.mxu0 %v204
    %232 = vmatpush.msra.mxu0 %v203
    %233 = vmatpush.msra.mxu0 %v202
    %234 = vmatmul.f32.gmra.mxu0 %v216
    %v235 = vpop.f32.mrf.mxu0
    %v236 = vadd.f32 %v212, %v235
    %237 = vdwg.mxu0
    %vm238 = vcmp.ge.f32.partialorder %v236, 0.0
    %v239 = vmul.f32 %v236, 0.01
    %v240 = vsel %vm238, %v236, %v239
    %s241 = sxor.u32 %s118, 2445500261
    %v242 = vstv %s241
    %v243 = vxor.u32 %v117, %v242
    %v244 = vshrl.u32 %v243, 16
    %v245 = vxor.u32 %v243, %v244
    %v246 = vmul.u32 %v245, 2146121005
    %v247 = vshrl.u32 %v246, 15
    %v248 = vxor.u32 %v246, %v247
    %v249 = vmul.u32 %v248, 2221713035
    %v250 = vshrl.u32 %v249, 16
    %v251 = vxor.u32 %v249, %v250
    %v252 = vadd.s32 %v251, 2654435769
    %v253 = vshrl.u32 %v252, 16
    %v254 = vxor.u32 %v252, %v253
    %v255 = vmul.u32 %v254, 2146121005
    %v256 = vshrl.u32 %v255, 15
    %v257 = vxor.u32 %v255, %v256
    %v258 = vmul.u32 %v257, 2221713035
    %v259 = vshrl.u32 %v258, 16
    %v260 = vxor.u32 %v258, %v259
    %v261 = vadd.s32 %v260, 2147483648
    %vm263 = vcmp.ge.s32.totalorder %v261, 0
    %v264 = vsel %vm263, %v240, 0.0
    %265 = vst [vmem:[#allocation3] sm:$0xff] %v264
    // Predicated region
    $region34: #{tpu_custom_call.1} parent=1 // pred_check
      _
    $region35: #{tpu_custom_call.1} parent=1 // pred_check_branch
      %267 = sbr.rel (0) target = $region37
    $region36: #{tpu_custom_call.1} parent=1 // pred_region
      %269 = vsyncadd [#allocation4], 0
      %s271 = sshll.u32 [#allocation3], 4
      %s272 = int_to_ptr.vmem [resolvable:$true] %s271
      %s273 = sshll.u32 %s8, 4
      %s274 = int_to_ptr.hbm [resolvable:$true] %s273
      %276 = dma.vmem_to_hbm [thread:$0]  %s272, 128, %s274, [#allocation4]
    $region37: #{tpu_custom_call.1} parent=1 // pred_fallthru
      _
    // Predicated region
    $region38: #{tpu_custom_call.1} parent=1 // pred_check
      _
    $region39: #{tpu_custom_call.1} parent=1 // pred_check_branch
      %278 = sbr.rel (0) target = $region41
    $region40: #{tpu_custom_call.1} parent=1 // pred_region
      %280 = dma.done [#allocation4], 128
    $region41: #{tpu_custom_call.1} parent=1 // pred_fallthru
      _
    %281 = vsyncpa [#allocation4], 1

</llo_original>
